<compile_context>
chip_gen: v7x
topology: tpu7x:2x2x1
jax: 0.10.0
libtpu: 0.0.40
codegen_flags: <defaults>
</compile_context>

<pallas_src>
import jax
import jax.numpy as jnp
from jax.experimental import pallas as pl
from jax.experimental.pallas import tpu as pltpu

EPS = 1e-5


def prenorm_kernel(x_ref, g_ref, b_ref, w_ref, fb_ref, o_ref):
    # x_ref / o_ref: (C, TL)   g_ref / b_ref / fb_ref: (C, 1)   w_ref: (C, C)
    x = x_ref[...].astype(jnp.float32)                       # (C, TL)

    # --- LayerNorm over channel (sublane) axis ---
    # Fused: two independent sublane reductions (mean, mean of squares).
    mean = jnp.mean(x, axis=0, keepdims=True)                # (1, TL)
    mean_sq = jnp.mean(x * x, axis=0, keepdims=True)         # (1, TL)
    var = jnp.maximum(mean_sq - mean * mean, 0.0)            # biased variance
    xn = (x - mean) * jax.lax.rsqrt(var + EPS)               # (C, TL)
    xn = xn * g_ref[...] + b_ref[...]                        # per-channel affine

    # --- fn: pointwise Conv1d(dim, dim, 1)  ==  W @ xn  (contract over C_in) ---
    y = jnp.dot(w_ref[...], xn, preferred_element_type=jnp.float32)  # (C, TL)
    o_ref[...] = (y + fb_ref[...]).astype(o_ref.dtype)


def _pick_seq_tile(L, C, itemsize, budget_bytes=12 << 20):
    """Largest lane tile TL that is a multiple of 128, divides L, and keeps
    2x(input block) + 2x(output block) + weights under ~12 MiB (v7x-safe,
    leaves double-buffering headroom within the 32 MiB scoped VMEM limit)."""
    if L % 128 != 0:
        return L                                 # small / odd L: full-extent block
    w_bytes = C * C * 4
    cap = max((budget_bytes - w_bytes) // (4 * C * itemsize), 128)
    tl = 128
    for cand in range(128, L + 1, 128):
        if L % cand == 0 and cand <= cap:
            tl = cand
    return tl


def prenorm(x_ncl, g, b, conv_w, conv_b):
    """x_ncl: (B, C, L).  Returns (B, C, L), matching PyTorch PreNorm(Conv1d 1x1)."""
    B, C, L = x_ncl.shape
    TL = _pick_seq_tile(L, C, x_ncl.dtype.itemsize)

    g2 = g.reshape(C, 1).astype(jnp.float32)                 # (1,C,1) -> (C,1)
    b2 = b.reshape(C, 1).astype(jnp.float32)
    w2 = conv_w[:, :, 0].astype(jnp.float32)                 # (C_out, C_in)
    fb2 = conv_b.reshape(C, 1).astype(jnp.float32)

    return pl.pallas_call(
        prenorm_kernel,
        out_shape=jax.ShapeDtypeStruct((B, C, L), x_ncl.dtype),
        grid_spec=pltpu.PrefetchScalarGridSpec(
            num_scalar_prefetch=0,
            grid=(B, L // TL),
            in_specs=[
                pl.BlockSpec((pl.Squeezed(), C, TL), lambda bi, li: (bi, 0, li)),  # x
                pl.BlockSpec((C, 1), lambda bi, li: (0, 0)),                       # g
                pl.BlockSpec((C, 1), lambda bi, li: (0, 0)),                       # b
                pl.BlockSpec((C, C), lambda bi, li: (0, 0)),                       # conv W
                pl.BlockSpec((C, 1), lambda bi, li: (0, 0)),                       # conv bias
            ],
            out_specs=pl.BlockSpec((pl.Squeezed(), C, TL),
                                   lambda bi, li: (bi, 0, li)),
        ),
        compiler_params=pltpu.CompilerParams(
            dimension_semantics=("parallel", "parallel"),
            vmem_limit_bytes=32 * 1024 * 1024,
        ),
    )(x_ncl, g2, b2, w2, fb2)


def prenorm_reference(x_ncl, g, b, conv_w, conv_b):
    """Pure-JAX reference mirroring the PyTorch forward exactly."""
    mean = jnp.mean(x_ncl, axis=1, keepdims=True)
    var = jnp.mean((x_ncl - mean) ** 2, axis=1, keepdims=True)     # unbiased=False
    xn = (x_ncl - mean) / jnp.sqrt(var + EPS) * g + b
    # Conv1d with kernel_size=1: out[b, o, l] = sum_i w[o, i, 0] * xn[b, i, l] + bias[o]
    return jnp.einsum("oi,bil->bol", conv_w[:, :, 0], xn) + conv_b[None, :, None]


if __name__ == "__main__":
    key = jax.random.PRNGKey(0)
    k_x1, k_x2, k_w, k_b = jax.random.split(key, 4)

    C = 32  # dim = 32 channels

    # LayerNorm params: PyTorch init -> ones / zeros.
    g = jnp.ones((1, C, 1), dtype=jnp.float32)
    b = jnp.zeros((1, C, 1), dtype=jnp.float32)

    # fn = Conv1d(dim, dim, 1) params, deterministic synthetic init.
    conv_w = jax.random.normal(k_w, (C, C, 1), dtype=jnp.float32) * 0.05
    conv_b = jax.random.normal(k_b, (C,), dtype=jnp.float32) * 0.05

    # Two shapes: L=256 exercises the tiled lane-dense path (TL multiple of 128),
    # L=16 exercises the full-extent fallback for small sequence lengths.
    for kx, (B, L) in ((k_x1, (2, 256)), (k_x2, (2, 16))):
        x = jax.random.normal(kx, (B, C, L), dtype=jnp.float32)
        out = jax.block_until_ready(prenorm(x, g, b, conv_w, conv_b))
        ref = prenorm_reference(x, g, b, conv_w, conv_b)
        assert out.shape == (B, C, L)
        assert jnp.allclose(out, ref, atol=1e-4, rtol=1e-4), (B, L)

    print("KERNEL_OK")
</pallas_src>

<mosaic_0001>
module attributes {stable_mosaic.version = 11 : i64} {
  func.func @prenorm_kernel(%arg0: i32, %arg1: i32, %arg2: memref<1x32x256xf32, #tpu.memory_space<vmem>>, %arg3: memref<32x1xf32, #tpu.memory_space<vmem>>, %arg4: memref<32x1xf32, #tpu.memory_space<vmem>>, %arg5: memref<32x32xf32, #tpu.memory_space<vmem>>, %arg6: memref<32x1xf32, #tpu.memory_space<vmem>>, %arg7: memref<1x32x256xf32, #tpu.memory_space<vmem>>) attributes {dimension_semantics = [#tpu.dimension_semantics<parallel>, #tpu.dimension_semantics<parallel>], iteration_bounds = array<i64: 2, 1>, scalar_prefetch = 0 : i64, scratch_operands = 0 : i64, tpu.core_type = #tpu.core_type<tc>, window_params = [{transform_indices = @transform_0, window_bounds = array<i64: 1, 32, 256>}, {pipeline_mode = #tpu.pipeline_mode<synchronous>, transform_indices = @transform_1, window_bounds = array<i64: 32, 1>}, {pipeline_mode = #tpu.pipeline_mode<synchronous>, transform_indices = @transform_2, window_bounds = array<i64: 32, 1>}, {pipeline_mode = #tpu.pipeline_mode<synchronous>, transform_indices = @transform_3, window_bounds = array<i64: 32, 32>}, {pipeline_mode = #tpu.pipeline_mode<synchronous>, transform_indices = @transform_4, window_bounds = array<i64: 32, 1>}, {transform_indices = @transform_5, window_bounds = array<i64: 1, 32, 256>}]} {
    %c0 = arith.constant 0 : index
    %c0_0 = arith.constant 0 : index
    %c0_1 = arith.constant 0 : index
    %0 = vector.load %arg2[%c0, %c0_0, %c0_1] : memref<1x32x256xf32, #tpu.memory_space<vmem>>, vector<1x32x256xf32>
    %1 = vector.shape_cast %0 : vector<1x32x256xf32> to vector<32x256xf32>
    %cst = arith.constant dense<0.000000e+00> : vector<256xf32>
    %2 = vector.multi_reduction <add>, %1, %cst [0] : vector<32x256xf32> to vector<256xf32>
    %3 = vector.shape_cast %2 : vector<256xf32> to vector<1x256xf32>
    %cst_2 = arith.constant 3.200000e+01 : f32
    %4 = vector.broadcast %cst_2 : f32 to vector<1x256xf32>
    %5 = arith.divf %3, %4 : vector<1x256xf32>
    %6 = arith.mulf %1, %1 : vector<32x256xf32>
    %cst_3 = arith.constant dense<0.000000e+00> : vector<256xf32>
    %7 = vector.multi_reduction <add>, %6, %cst_3 [0] : vector<32x256xf32> to vector<256xf32>
    %8 = vector.shape_cast %7 : vector<256xf32> to vector<1x256xf32>
    %cst_4 = arith.constant 3.200000e+01 : f32
    %9 = vector.broadcast %cst_4 : f32 to vector<1x256xf32>
    %10 = arith.divf %8, %9 : vector<1x256xf32>
    %11 = arith.mulf %5, %5 : vector<1x256xf32>
    %12 = arith.subf %10, %11 : vector<1x256xf32>
    %cst_5 = arith.constant 0.000000e+00 : f32
    %13 = vector.broadcast %cst_5 : f32 to vector<1x256xf32>
    %14 = arith.maximumf %12, %13 : vector<1x256xf32>
    %15 = vector.broadcast %5 : vector<1x256xf32> to vector<32x256xf32>
    %16 = arith.subf %1, %15 : vector<32x256xf32>
    %cst_6 = arith.constant 9.99999974E-6 : f32
    %17 = vector.broadcast %cst_6 : f32 to vector<1x256xf32>
    %18 = arith.addf %14, %17 : vector<1x256xf32>
    %19 = math.rsqrt %18 : vector<1x256xf32>
    %20 = vector.broadcast %19 : vector<1x256xf32> to vector<32x256xf32>
    %21 = arith.mulf %16, %20 : vector<32x256xf32>
    %c0_7 = arith.constant 0 : index
    %c0_8 = arith.constant 0 : index
    %22 = vector.load %arg3[%c0_7, %c0_8] : memref<32x1xf32, #tpu.memory_space<vmem>>, vector<32x1xf32>
    %23 = vector.broadcast %22 : vector<32x1xf32> to vector<32x256xf32>
    %24 = arith.mulf %21, %23 : vector<32x256xf32>
    %c0_9 = arith.constant 0 : index
    %c0_10 = arith.constant 0 : index
    %25 = vector.load %arg4[%c0_9, %c0_10] : memref<32x1xf32, #tpu.memory_space<vmem>>, vector<32x1xf32>
    %26 = vector.broadcast %25 : vector<32x1xf32> to vector<32x256xf32>
    %27 = arith.addf %24, %26 : vector<32x256xf32>
    %c0_11 = arith.constant 0 : index
    %c0_12 = arith.constant 0 : index
    %28 = vector.load %arg5[%c0_11, %c0_12] : memref<32x32xf32, #tpu.memory_space<vmem>>, vector<32x32xf32>
    %cst_13 = arith.constant dense<0.000000e+00> : vector<32x256xf32>
    %29 = tpu.matmul %28, %27, %cst_13 {dimension_numbers = #tpu.dot_dimension_numbers<[1], [0], [0], [1], [0, 0, 1, 1], [], []>} : vector<32x32xf32>, vector<32x256xf32>, vector<32x256xf32> -> vector<32x256xf32>
    %c0_14 = arith.constant 0 : index
    %c0_15 = arith.constant 0 : index
    %30 = vector.load %arg6[%c0_14, %c0_15] : memref<32x1xf32, #tpu.memory_space<vmem>>, vector<32x1xf32>
    %31 = vector.broadcast %30 : vector<32x1xf32> to vector<32x256xf32>
    %32 = arith.addf %29, %31 : vector<32x256xf32>
    %c0_16 = arith.constant 0 : index
    %c0_17 = arith.constant 0 : index
    %c0_18 = arith.constant 0 : index
    %33 = vector.load %arg7[%c0_16, %c0_17, %c0_18] : memref<1x32x256xf32, #tpu.memory_space<vmem>>, vector<1x32x256xf32>
    %34 = vector.shape_cast %33 : vector<1x32x256xf32> to vector<32x256xf32>
    %35 = vector.shape_cast %32 : vector<32x256xf32> to vector<1x32x256xf32>
    tpu.vector_store %arg7[%c0_16, %c0_17, %c0_18], %35 {strides = array<i32>} : memref<1x32x256xf32, #tpu.memory_space<vmem>>, vector<1x32x256xf32>,
    return
  }
  func.func @transform_0(%arg0: i32, %arg1: i32) -> (i32, i32, i32) {
    %c0_i32 = arith.constant 0 : i32
    %c0_i32_0 = arith.constant 0 : i32
    return %arg0, %c0_i32, %arg1 : i32, i32, i32
  }
  func.func @transform_1(%arg0: i32, %arg1: i32) -> (i32, i32) {
    %c0_i32 = arith.constant 0 : i32
    %c0_i32_0 = arith.constant 0 : i32
    %c0_i32_1 = arith.constant 0 : i32
    return %c0_i32, %c0_i32_0 : i32, i32
  }
  func.func @transform_2(%arg0: i32, %arg1: i32) -> (i32, i32) {
    %c0_i32 = arith.constant 0 : i32
    %c0_i32_0 = arith.constant 0 : i32
    %c0_i32_1 = arith.constant 0 : i32
    return %c0_i32, %c0_i32_0 : i32, i32
  }
  func.func @transform_3(%arg0: i32, %arg1: i32) -> (i32, i32) {
    %c0_i32 = arith.constant 0 : i32
    %c0_i32_0 = arith.constant 0 : i32
    %c0_i32_1 = arith.constant 0 : i32
    return %c0_i32, %c0_i32_0 : i32, i32
  }
  func.func @transform_4(%arg0: i32, %arg1: i32) -> (i32, i32) {
    %c0_i32 = arith.constant 0 : i32
    %c0_i32_0 = arith.constant 0 : i32
    %c0_i32_1 = arith.constant 0 : i32
    return %c0_i32, %c0_i32_0 : i32, i32
  }
  func.func @transform_5(%arg0: i32, %arg1: i32) -> (i32, i32, i32) {
    %c0_i32 = arith.constant 0 : i32
    %c0_i32_0 = arith.constant 0 : i32
    return %arg0, %c0_i32, %arg1 : i32, i32, i32
  }
}

</mosaic_0001>

<llo_original>
// kernel: tpu_custom_call.1
$region0: #{tpu_custom_call.1}
  #allocation0 [shape = 'u32[]', space=smem, size = 0x4, offset = 0x4, fixed_abs, tag = 'smem constant byte address 0x4 - core index']
  #allocation1 [shape = 'u32[144,128]{1,0:T(1,128)}', space=vmem, size = 0x12000, scoped, tag = 'internal scratch']
  %s0 = inlined_call_operand.hbm [shape: f32[2,32,256], index: 0, kind: input, shape index: {}]
  %s1 = inlined_call_operand.vmem [shape: f32[32,1], index: 1, kind: input, shape index: {}]
  %s2 = inlined_call_operand.vmem [shape: f32[32,1], index: 2, kind: input, shape index: {}]
  %s3 = inlined_call_operand.vmem [shape: f32[32,32], index: 3, kind: input, shape index: {}]
  %s4 = inlined_call_operand.vmem [shape: f32[32,1], index: 4, kind: input, shape index: {}]
  %s5 = inlined_call_operand.hbm [shape: f32[2,32,256], index: 5, kind: output, shape index: {}]
  %s6 = sld [smem:[#allocation0]]
  $region57: #{tpu_custom_call.1} parent=0
    _
  %s8 = ssub.s32 1, %s6
  %s9 = scalar_select 0, %s8, %s6
  $region1: #{tpu_custom_call.1} parent=0
    #allocation2 [shape = 'u8[65536]{0}', space=vmem, size = 0x10000, scoped, tag = 'input window, operand 0']
    #allocation3 [shape = 's32[2]{0}', space=sflag, size = 0x8, scoped, tag = 'scoped memory for tpu_custom_call.1']
    #allocation4 [shape = 's32[2]{0}', space=sflag, size = 0x8, scoped, tag = 'scoped memory for tpu_custom_call.1']
    #allocation5 [shape = 'u8[65536]{0}', space=vmem, size = 0x10000, scoped, tag = 'output window, operand 0']
    %10 = vsyncpa [#allocation3], 0
    %s11 = scalar_lea.sflag [#allocation3], 1
    %12 = vsyncpa %s11, 0
    %13 = vsyncpa [#allocation4], 0
    %s14 = scalar_lea.sflag [#allocation4], 1
    %15 = vsyncpa %s14, 0
    loop: start=0, step=1, limit=4
    $region2: #{tpu_custom_call.1} parent=1 // loop_pre_header
      _
    $region3: #{tpu_custom_call.1} parent=1 // loop_header
      %s17 = sphi 0, %s21
      %p18 = scmp.ge.s32.totalorder %s17, 4
      %s24 = sphi 0, %s36
      %s25 = sphi 0, %s32
      %s26 = sphi 0, %s24
      %s27 = sphi 0, %s25
      %s28 = sphi 0, %s26
      %s29 = sphi 0, %s27
      %s41 = sphi 0, %s43
      %s44 = sphi 0, %s41
      %s45 = sphi 0, %s44
      %s61 = sphi 0, %s45
      %s65 = sphi 0, %s65
      %s67 = sphi 0, %s65
      %s68 = sphi 0, %s67
      %s82 = sphi 0, %s68
      %s86 = sphi 0, %s86
      %s88 = sphi 0, %s86
      %s89 = sphi 0, %s88
      %s103 = sphi 0, %s89
      %s107 = sphi 0, %s107
      %s109 = sphi 0, %s107
      %s110 = sphi 0, %s109
      %s124 = sphi 0, %s110
      %s128 = sphi 0, %s128
      %s130 = sphi 0, %s128
      %s131 = sphi 0, %s130
      %s145 = sphi 0, %s131
      %s153 = sphi 0, %s155
      %s156 = sphi 0, %s153
      %s157 = sphi 0, %s156
      %s173 = sphi 0, %s157
    $region4: #{tpu_custom_call.1} parent=1 // loop_header_branch
      %20 = sbr.rel (%p18) target = $region8
    $region5: #{tpu_custom_call.1} parent=1 // loop_body
      %s22 = ssub.s32 %s17, 1
      %s23 = ssub.s32 %s17, 2
      %s30 = sadd.s32 1, %s25
      %p31 = scmp.ge.s32.totalorder %s30, 1
      %s32 = scalar_select %p31, 0, %s30
      %s33 = sadd.s32 1, %s24
      %s34 = scalar_select %p31, %s33, %s24
      %p35 = scmp.ge.s32.totalorder %s34, 2
      %s36 = scalar_select %p35, 0, %s34
      %s37 = ssub.s32 %s24, %s36
      %s38 = ssub.s32 %s25, %s32
      %s39 = sor.u32 %s37, %s38
      %p40 = scmp.eq.s32.totalorder %s39, 0
      %s42 = sadd.s32 %s41, 1
      %s43 = scalar_select %p40, %s41, %s42
      %p46 = pneg %p40
      %p47 = scmp.eq.s32.totalorder %s17, 1
      %p48 = por %p46, %p47
      %p49 = scmp.ne.s32.totalorder %s41, %s44
      %p50 = scmp.eq.s32.totalorder %s17, 0
      %p51 = por %p49, %p50
      %p52 = scmp.ne.s32.totalorder %s41, %s44
      %p53 = scmp.eq.s32.totalorder %s22, 1
      %p54 = por %p52, %p53
      %p55 = scmp.ne.s32.totalorder %s44, %s45
      %p56 = scmp.eq.s32.totalorder %s22, 0
      %p57 = por %p55, %p56
      %p58 = scmp.ne.s32.totalorder %s44, %s45
      %p59 = scmp.eq.s32.totalorder %s23, 1
      %p60 = por %p58, %p59
      %p62 = scmp.ne.s32.totalorder %s45, %s61
      %p63 = scmp.eq.s32.totalorder %s23, 0
      %p64 = por %p62, %p63
      %s66 = sadd.s32 %s65, 1
      %p69 = scmp.eq.s32.totalorder %s17, 1
      %p70 = scmp.ne.s32.totalorder %s65, %s67
      %p71 = scmp.eq.s32.totalorder %s17, 0
      %p72 = por %p70, %p71
      %p73 = scmp.ne.s32.totalorder %s65, %s67
      %p74 = scmp.eq.s32.totalorder %s22, 1
      %p75 = por %p73, %p74
      %p76 = scmp.ne.s32.totalorder %s67, %s68
      %p77 = scmp.eq.s32.totalorder %s22, 0
      %p78 = por %p76, %p77
      %p79 = scmp.ne.s32.totalorder %s67, %s68
      %p80 = scmp.eq.s32.totalorder %s23, 1
      %p81 = por %p79, %p80
      %p83 = scmp.ne.s32.totalorder %s68, %s82
      %p84 = scmp.eq.s32.totalorder %s23, 0
      %p85 = por %p83, %p84
      %s87 = sadd.s32 %s86, 1
      %p90 = scmp.eq.s32.totalorder %s17, 1
      %p91 = scmp.ne.s32.totalorder %s86, %s88
      %p92 = scmp.eq.s32.totalorder %s17, 0
      %p93 = por %p91, %p92
      %p94 = scmp.ne.s32.totalorder %s86, %s88
      %p95 = scmp.eq.s32.totalorder %s22, 1
      %p96 = por %p94, %p95
      %p97 = scmp.ne.s32.totalorder %s88, %s89
      %p98 = scmp.eq.s32.totalorder %s22, 0
      %p99 = por %p97, %p98
      %p100 = scmp.ne.s32.totalorder %s88, %s89
      %p101 = scmp.eq.s32.totalorder %s23, 1
      %p102 = por %p100, %p101
      %p104 = scmp.ne.s32.totalorder %s89, %s103
      %p105 = scmp.eq.s32.totalorder %s23, 0
      %p106 = por %p104, %p105
      %s108 = sadd.s32 %s107, 1
      %p111 = scmp.eq.s32.totalorder %s17, 1
      %p112 = scmp.ne.s32.totalorder %s107, %s109
      %p113 = scmp.eq.s32.totalorder %s17, 0
      %p114 = por %p112, %p113
      %p115 = scmp.ne.s32.totalorder %s107, %s109
      %p116 = scmp.eq.s32.totalorder %s22, 1
      %p117 = por %p115, %p116
      %p118 = scmp.ne.s32.totalorder %s109, %s110
      %p119 = scmp.eq.s32.totalorder %s22, 0
      %p120 = por %p118, %p119
      %p121 = scmp.ne.s32.totalorder %s109, %s110
      %p122 = scmp.eq.s32.totalorder %s23, 1
      %p123 = por %p121, %p122
      %p125 = scmp.ne.s32.totalorder %s110, %s124
      %p126 = scmp.eq.s32.totalorder %s23, 0
      %p127 = por %p125, %p126
      %s129 = sadd.s32 %s128, 1
      %p132 = scmp.eq.s32.totalorder %s17, 1
      %p133 = scmp.ne.s32.totalorder %s128, %s130
      %p134 = scmp.eq.s32.totalorder %s17, 0
      %p135 = por %p133, %p134
      %p136 = scmp.ne.s32.totalorder %s128, %s130
      %p137 = scmp.eq.s32.totalorder %s22, 1
      %p138 = por %p136, %p137
      %p139 = scmp.ne.s32.totalorder %s130, %s131
      %p140 = scmp.eq.s32.totalorder %s22, 0
      %p141 = por %p139, %p140
      %p142 = scmp.ne.s32.totalorder %s130, %s131
      %p143 = scmp.eq.s32.totalorder %s23, 1
      %p144 = por %p142, %p143
      %p146 = scmp.ne.s32.totalorder %s131, %s145
      %p147 = scmp.eq.s32.totalorder %s23, 0
      %p148 = por %p146, %p147
      %s149 = ssub.s32 %s24, %s36
      %s150 = ssub.s32 %s25, %s32
      %s151 = sor.u32 %s149, %s150
      %p152 = scmp.eq.s32.totalorder %s151, 0
      %s154 = sadd.s32 %s153, 1
      %s155 = scalar_select %p152, %s153, %s154
      %p158 = pneg %p152
      %p159 = scmp.eq.s32.totalorder %s17, 1
      %p160 = por %p158, %p159
      %p161 = scmp.ne.s32.totalorder %s153, %s156
      %p162 = scmp.eq.s32.totalorder %s17, 0
      %p163 = por %p161, %p162
      %p164 = scmp.ne.s32.totalorder %s153, %s156
      %p165 = scmp.eq.s32.totalorder %s22, 1
      %p166 = por %p164, %p165
      %p167 = scmp.ne.s32.totalorder %s156, %s157
      %p168 = scmp.eq.s32.totalorder %s22, 0
      %p169 = por %p167, %p168
      %p170 = scmp.ne.s32.totalorder %s156, %s157
      %p171 = scmp.eq.s32.totalorder %s23, 1
      %p172 = por %p170, %p171
      %p174 = scmp.ne.s32.totalorder %s157, %s173
      %p175 = scmp.eq.s32.totalorder %s23, 0
      %p176 = por %p174, %p175
      %p177 = scmp.le.s32.totalorder 1, %s17
      %p178 = scmp.lt.s32.totalorder %s17, 3
      %p179 = pnand %p177, %p178
      %p180 = pneg %p179
      // Predicated region
      $region9: #{tpu_custom_call.1} parent=5 // pred_check
        _
      $region10: #{tpu_custom_call.1} parent=5 // pred_check_branch
        %182 = sbr.rel (%p179) target = $region12
      $region11: #{tpu_custom_call.1} parent=5 // pred_region
        %s183 = ssub.s32 %s17, 1
        // Predicated region
        $region13: #{tpu_custom_call.1} parent=11 // pred_check
          %p184 = pneg %p78
        $region14: #{tpu_custom_call.1} parent=11 // pred_check_branch
          %186 = sbr.rel (%p184) target = $region16
        $region15: #{tpu_custom_call.1} parent=11 // pred_region
          _
        $region16: #{tpu_custom_call.1} parent=11 // pred_fallthru
          _
        // Predicated region
        $region17: #{tpu_custom_call.1} parent=11 // pred_check
          %p187 = pneg %p99
        $region18: #{tpu_custom_call.1} parent=11 // pred_check_branch
          %189 = sbr.rel (%p187) target = $region20
        $region19: #{tpu_custom_call.1} parent=11 // pred_region
          _
        $region20: #{tpu_custom_call.1} parent=11 // pred_fallthru
          _
        // Predicated region
        $region21: #{tpu_custom_call.1} parent=11 // pred_check
          %p190 = pneg %p120
        $region22: #{tpu_custom_call.1} parent=11 // pred_check_branch
          %192 = sbr.rel (%p190) target = $region24
        $region23: #{tpu_custom_call.1} parent=11 // pred_region
          _
        $region24: #{tpu_custom_call.1} parent=11 // pred_fallthru
          _
        // Predicated region
        $region25: #{tpu_custom_call.1} parent=11 // pred_check
          %p193 = pneg %p141
        $region26: #{tpu_custom_call.1} parent=11 // pred_check_branch
          %195 = sbr.rel (%p193) target = $region28
        $region27: #{tpu_custom_call.1} parent=11 // pred_region
          _
        $region28: #{tpu_custom_call.1} parent=11 // pred_fallthru
          _
      $region12: #{tpu_custom_call.1} parent=5 // pred_fallthru
        _
      %p196 = scmp.lt.s32.totalorder %s17, 2
      // Predicated region
      $region29: #{tpu_custom_call.1} parent=5 // pred_check
        %p197 = pneg %p196
      $region30: #{tpu_custom_call.1} parent=5 // pred_check_branch
        %199 = sbr.rel (%p197) target = $region32
      $region31: #{tpu_custom_call.1} parent=5 // pred_region
        // Predicated region
        $region33: #{tpu_custom_call.1} parent=31 // pred_check
          %p200 = pneg %p51
        $region34: #{tpu_custom_call.1} parent=31 // pred_check_branch
          %202 = sbr.rel (%p200) target = $region36
        $region35: #{tpu_custom_call.1} parent=31 // pred_region
          %s203 = sand.u32 %s41, 1
          %s204 = scalar_lea.sflag [#allocation3], %s203
          %s205 = sand.u32 %s41, 1
          %s206 = smul.addr %s205, 64
          %s207 = scalar_lea.vmem [#allocation2], %s206
          %s208 = smul.u32 2, %s25
          %s210 = ssub.s32 1024, 1024
          %211 = vsyncadd %s204, %s210
          %s212 = smul.addr %s24, 8
          %s213 = sadd.s32 %s208, %s212
          %s214 = smul.addr %s213, 128
          %s215 = scalar_lea.hbm %s0, %s214
          %s216 = sshll.u32 %s207, 4
          %s217 = int_to_ptr.vmem [resolvable:$true] %s216
          %222 = dma.hbm_to_vmem [thread:$0]  %s215, 1024, %s217, %s204, 256, 256, 16
        $region36: #{tpu_custom_call.1} parent=31 // pred_fallthru
          _
      $region32: #{tpu_custom_call.1} parent=5 // pred_fallthru
        _
      %p223 = scmp.le.s32.totalorder 1, %s17
      %p224 = scmp.lt.s32.totalorder %s17, 3
      %p225 = pnand %p223, %p224
      %p226 = pneg %p225
      // Predicated region
      $region37: #{tpu_custom_call.1} parent=5 // pred_check
        _
      $region38: #{tpu_custom_call.1} parent=5 // pred_check_branch
        %228 = sbr.rel (%p225) target = $region40
      $region39: #{tpu_custom_call.1} parent=5 // pred_region
        %s229 = ssub.s32 %s17, 1
        %s230 = sand.u32 %s44, 1
        %s231 = scalar_lea.sflag [#allocation3], %s230
        %s232 = sand.u32 %s44, 1
        %s233 = smul.addr %s232, 64
        %s234 = scalar_lea.vmem [#allocation2], %s233
        // Predicated region
        $region41: #{tpu_custom_call.1} parent=39 // pred_check
          %p235 = pneg %p57
        $region42: #{tpu_custom_call.1} parent=39 // pred_check_branch
          %237 = sbr.rel (%p235) target = $region44
        $region43: #{tpu_custom_call.1} parent=39 // pred_region
          %238 = dma.done %s231, 1024
        $region44: #{tpu_custom_call.1} parent=39 // pred_fallthru
          _
        %s239 = sand.u32 %s44, 1
        %s240 = scalar_lea.sflag [#allocation3], %s239
        %s241 = sand.u32 %s44, 1
        %s242 = smul.addr %s241, 64
        %s243 = scalar_lea.vmem [#allocation2], %s242
        %p244 = pneg %p57
        %p245 = pneg %p54
        %p246 = pneg %p78
        %p247 = pneg %p75
        %p248 = pneg %p99
        %p249 = pneg %p96
        %p250 = pneg %p120
        %p251 = pneg %p117
        %p252 = pneg %p141
        %p253 = pneg %p138
        %p254 = pneg %p169
        %p255 = pneg %p166
        %s256 = sand.u32 %s156, 1
        %s257 = scalar_lea.sflag [#allocation4], %s256
        %s258 = sand.u32 %s156, 1
        %s259 = smul.addr %s258, 64
        %s260 = scalar_lea.vmem [#allocation5], %s259
        %s261 = smul.u32 2, %s27
        %s262 = smul.u32 2, %s27
        %v263 = vld [vmem:[%s234] sm:$0xff]
        %v264 = vld [vmem:[%s234 + $0x8] sm:$0xff]
        %v265 = vld [vmem:[%s234 + $0x10] sm:$0xff]
        %v266 = vld [vmem:[%s234 + $0x18] sm:$0xff]
        %v267 = vld [vmem:[%s234 + $0x20] sm:$0xff]
        %v268 = vld [vmem:[%s234 + $0x28] sm:$0xff]
        %v269 = vld [vmem:[%s234 + $0x30] sm:$0xff]
        %v270 = vld [vmem:[%s234 + $0x38] sm:$0xff]
        %v271 = vadd.f32 %v263, %v265
        %v272 = vadd.f32 %v271, %v267
        %v273 = vadd.f32 %v272, %v269
        %v274 = vrot.slane %v273, 4
        %v275 = vadd.f32 %v273, %v274
        %v276 = vrot.slane %v275, 2
        %v277 = vadd.f32 %v275, %v276
        %v278 = vrot.slane %v277, 1
        %v279 = vadd.f32 %v277, %v278
        %v280 = vadd.f32 %v264, %v266
        %v281 = vadd.f32 %v280, %v268
        %v282 = vadd.f32 %v281, %v270
        %v283 = vrot.slane %v282, 4
        %v284 = vadd.f32 %v282, %v283
        %v285 = vrot.slane %v284, 2
        %v286 = vadd.f32 %v284, %v285
        %v287 = vrot.slane %v286, 1
        %v288 = vadd.f32 %v286, %v287
        %v289 = vrcp.pop 32.0
        %v290 = vmul.f32 %v279, %v289
        %v291 = vmul.f32 %v288, %v289
        %v292 = vmul.f32 %v263, %v263
        %v293 = vmul.f32 %v264, %v264
        %v294 = vmul.f32 %v265, %v265
        %v295 = vmul.f32 %v266, %v266
        %v296 = vmul.f32 %v267, %v267
        %v297 = vmul.f32 %v268, %v268
        %v298 = vmul.f32 %v269, %v269
        %v299 = vmul.f32 %v270, %v270
        %v300 = vadd.f32 %v292, %v294
        %v301 = vadd.f32 %v300, %v296
        %v302 = vadd.f32 %v301, %v298
        %v303 = vrot.slane %v302, 4
        %v304 = vadd.f32 %v302, %v303
        %v305 = vrot.slane %v304, 2
        %v306 = vadd.f32 %v304, %v305
        %v307 = vrot.slane %v306, 1
        %v308 = vadd.f32 %v306, %v307
        %v309 = vadd.f32 %v293, %v295
        %v310 = vadd.f32 %v309, %v297
        %v311 = vadd.f32 %v310, %v299
        %v312 = vrot.slane %v311, 4
        %v313 = vadd.f32 %v311, %v312
        %v314 = vrot.slane %v313, 2
        %v315 = vadd.f32 %v313, %v314
        %v316 = vrot.slane %v315, 1
        %v317 = vadd.f32 %v315, %v316
        %v318 = vmul.f32 %v308, %v289
        %v319 = vmul.f32 %v317, %v289
        %v320 = vmul.f32 %v290, %v290
        %v321 = vmul.f32 %v291, %v291
        %v322 = vsub.f32 %v318, %v320
        %v323 = vsub.f32 %v319, %v321
        %v324 = vmax.f32 %v322, 0.0
        %v325 = vmax.f32 %v323, 0.0
        %v326 = vsub.f32 %v263, %v290
        %v327 = vsub.f32 %v264, %v291
        %v328 = vsub.f32 %v265, %v290
        %v329 = vsub.f32 %v266, %v291
        %v330 = vsub.f32 %v267, %v290
        %v331 = vsub.f32 %v268, %v291
        %v332 = vsub.f32 %v269, %v290
        %v333 = vsub.f32 %v270, %v291
        %v334 = vadd.f32 %v324, 1e-05
        %v335 = vadd.f32 %v325, 1e-05
        %v336 = vrsqrt.pop %v334
        %v337 = vrsqrt.pop %v335
        %v338 = vmul.f32 %v326, %v336
        %v339 = vmul.f32 %v327, %v337
        %v340 = vmul.f32 %v328, %v336
        %v341 = vmul.f32 %v329, %v337
        %v342 = vmul.f32 %v330, %v336
        %v343 = vmul.f32 %v331, %v337
        %v344 = vmul.f32 %v332, %v336
        %v345 = vmul.f32 %v333, %v337
        %v346 = vld [vmem:[%s1] sm:$0xff]
        %v347 = vld [vmem:[%s1 + $0x8] sm:$0xff]
        %v348 = vld [vmem:[%s1 + $0x10] sm:$0xff]
        %v349 = vld [vmem:[%s1 + $0x18] sm:$0xff]
        %351 = vset.pattern.permute.xlu0 0
        %352 = vperm.xlu0 %351, %v346
        %v353 = vpop.permute.xlu0 %352
        %356 = vset.pattern.permute.xlu0 0
        %357 = vperm.xlu0 %356, %v347
        %v358 = vpop.permute.xlu0 %357
        %361 = vset.pattern.permute.xlu0 0
        %362 = vperm.xlu0 %361, %v348
        %v363 = vpop.permute.xlu0 %362
        %366 = vset.pattern.permute.xlu0 0
        %367 = vperm.xlu0 %366, %v349
        %v368 = vpop.permute.xlu0 %367
        %v370 = vmul.f32 %v338, %v353
        %v371 = vmul.f32 %v339, %v353
        %v372 = vmul.f32 %v340, %v358
        %v373 = vmul.f32 %v341, %v358
        %v374 = vmul.f32 %v342, %v363
        %v375 = vmul.f32 %v343, %v363
        %v376 = vmul.f32 %v344, %v368
        %v377 = vmul.f32 %v345, %v368
        %v378 = vld [vmem:[%s2] sm:$0xff]
        %v379 = vld [vmem:[%s2 + $0x8] sm:$0xff]
        %v380 = vld [vmem:[%s2 + $0x10] sm:$0xff]
        %v381 = vld [vmem:[%s2 + $0x18] sm:$0xff]
        %383 = vset.pattern.permute.xlu0 0
        %384 = vperm.xlu0 %383, %v378
        %v385 = vpop.permute.xlu0 %384
        %388 = vset.pattern.permute.xlu0 0
        %389 = vperm.xlu0 %388, %v379
        %v390 = vpop.permute.xlu0 %389
        %393 = vset.pattern.permute.xlu0 0
        %394 = vperm.xlu0 %393, %v380
        %v395 = vpop.permute.xlu0 %394
        %398 = vset.pattern.permute.xlu0 0
        %399 = vperm.xlu0 %398, %v381
        %v400 = vpop.permute.xlu0 %399
        %v402 = vadd.f32 %v370, %v385
        %v403 = vadd.f32 %v371, %v385
        %v404 = vadd.f32 %v372, %v390
        %v405 = vadd.f32 %v373, %v390
        %v406 = vadd.f32 %v374, %v395
        %v407 = vadd.f32 %v375, %v395
        %v408 = vadd.f32 %v376, %v400
        %v409 = vadd.f32 %v377, %v400
        %v410 = vld [vmem:[%s3] sm:$0xff]
        %v411 = vld [vmem:[%s3 + $0x8] sm:$0xff]
        %v412 = vld [vmem:[%s3 + $0x10] sm:$0xff]
        %v413 = vld [vmem:[%s3 + $0x18] sm:$0xff]
        %v414 = vld [vmem:[%s4] sm:$0xff]
        %v415 = vld [vmem:[%s4 + $0x8] sm:$0xff]
        %v416 = vld [vmem:[%s4 + $0x10] sm:$0xff]
        %v417 = vld [vmem:[%s4 + $0x18] sm:$0xff]
        %419 = vset.pattern.permute.xlu0 0
        %420 = vperm.xlu0 %419, %v414
        %v421 = vpop.permute.xlu0 %420
        %424 = vset.pattern.permute.xlu0 0
        %425 = vperm.xlu0 %424, %v415
        %v426 = vpop.permute.xlu0 %425
        %429 = vset.pattern.permute.xlu0 0
        %430 = vperm.xlu0 %429, %v416
        %v431 = vpop.permute.xlu0 %430
        %434 = vset.pattern.permute.xlu0 0
        %435 = vperm.xlu0 %434, %v417
        %v436 = vpop.permute.xlu0 %435
        %vm438 = vcmask 261120
        %v440 = vsel %vm438, %v410, 0
        %v443 = vsel %vm438, %v411, 0
        %v446 = vsel %vm438, %v412, 0
        %v449 = vsel %vm438, %v413, 0
        %451 = vmatprep.subr.mxu0 %v403
        %452 = vmatpush1.msra.mxu0 %v402
        %453 = vmatprep.subr.mxu0 %v405
        %454 = vmatpush1.msra.mxu0 %v404
        %455 = vmatprep.subr.mxu0 %v407
        %456 = vmatpush1.msra.mxu0 %v406
        %457 = vmatprep.subr.mxu0 %v409
        %458 = vmatpush1.msra.mxu0 %v408
        %459 = vmatprep.subr.mxu0 0.0
        %460 = vmatpush1.msra.mxu0 0.0
        %461 = vmatprep.subr.mxu0 0.0
        %462 = vmatpush1.msra.mxu0 0.0
        %463 = vmatprep.subr.mxu0 0.0
        %464 = vmatpush1.msra.mxu0 0.0
        %465 = vmatprep.subr.mxu0 0.0
        %466 = vmatpush1.msra.mxu0 0.0
        %467 = vmatprep.subr.mxu0 0.0
        %468 = vmatpush1.msra.mxu0 0.0
        %469 = vmatprep.subr.mxu0 0.0
        %470 = vmatpush1.msra.mxu0 0.0
        %471 = vmatprep.subr.mxu0 0.0
        %472 = vmatpush1.msra.mxu0 0.0
        %473 = vmatprep.subr.mxu0 0.0
        %474 = vmatpush1.msra.mxu0 0.0
        %475 = vmatprep.subr.mxu0 0.0
        %476 = vmatpush1.msra.mxu0 0.0
        %477 = vmatprep.subr.mxu0 0.0
        %478 = vmatpush1.msra.mxu0 0.0
        %479 = vmatprep.subr.mxu0 0.0
        %480 = vmatpush1.msra.mxu0 0.0
        %481 = vmatprep.subr.mxu0 0.0
        %482 = vmatpush1.msra.mxu0 0.0
        %483 = vmatprep.subr.mxu0 0.0
        %484 = vmatpush1.msra.mxu0 0.0
        %485 = vmatprep.subr.mxu0 0.0
        %486 = vmatpush1.msra.mxu0 0.0
        %487 = vmatprep.subr.mxu0 0.0
        %488 = vmatpush1.msra.mxu0 0.0
        %489 = vmatprep.subr.mxu0 0.0
        %490 = vmatpush1.msra.mxu0 0.0
        %491 = vmatprep.subr.mxu0 0.0
        %492 = vmatpush1.msra.mxu0 0.0
        %493 = vmatprep.subr.mxu0 0.0
        %494 = vmatpush1.msra.mxu0 0.0
        %495 = vmatprep.subr.mxu0 0.0
        %496 = vmatpush1.msra.mxu0 0.0
        %497 = vmatprep.subr.mxu0 0.0
        %498 = vmatpush1.msra.mxu0 0.0
        %499 = vmatprep.subr.mxu0 0.0
        %500 = vmatpush1.msra.mxu0 0.0
        %501 = vmatprep.subr.mxu0 0.0
        %502 = vmatpush1.msra.mxu0 0.0
        %503 = vmatprep.subr.mxu0 0.0
        %504 = vmatpush1.msra.mxu0 0.0
        %505 = vmatprep.subr.mxu0 0.0
        %506 = vmatpush1.msra.mxu0 0.0
        %507 = vmatprep.subr.mxu0 0.0
        %508 = vmatpush1.msra.mxu0 0.0
        %509 = vmatprep.subr.mxu0 0.0
        %510 = vmatpush1.msra.mxu0 0.0
        %511 = vmatprep.subr.mxu0 0.0
        %512 = vmatpush1.msra.mxu0 0.0
        %513 = vmatprep.subr.mxu0 0.0
        %514 = vmatpush1.msra.mxu0 0.0
        %515 = vmatprep.mubr.f32.mxu0 0.0
        %516 = vmatmul.mubr.f32.gmra.mrb[0].mxu0 %v440
        %v517 = vpop.f32.mrb[0].mxu0
        %v518 = vadd.f32 %v421, %v517
        %v519 = vpop.f32.mrb[0].mxu0
        %v520 = vadd.f32 %v421, %v519
        %521 = vmatprep.mubr.f32.mxu0 0.0
        %522 = vmatmul.mubr.f32.gmra.mrb[0].mxu0 %v443
        %v523 = vpop.f32.mrb[0].mxu0
        %v524 = vadd.f32 %v426, %v523
        %v525 = vpop.f32.mrb[0].mxu0
        %v526 = vadd.f32 %v426, %v525
        %527 = vmatprep.mubr.f32.mxu0 0.0
        %528 = vmatmul.mubr.f32.gmra.mrb[0].mxu0 %v446
        %v529 = vpop.f32.mrb[0].mxu0
        %v530 = vadd.f32 %v431, %v529
        %v531 = vpop.f32.mrb[0].mxu0
        %v532 = vadd.f32 %v431, %v531
        %533 = vmatprep.mubr.f32.mxu0 0.0
        %534 = vmatmul.mubr.f32.gmra.mrb[0].mxu0 %v449
        %v535 = vpop.f32.mrb[0].mxu0
        %v536 = vadd.f32 %v436, %v535
        %v537 = vpop.f32.mrb[0].mxu0
        %v538 = vadd.f32 %v436, %v537
        %539 = vdwg.mxu0
        %540 = vst [vmem:[%s260] sm:$0xff] %v518
        %541 = vst [vmem:[%s260 + $0x8] sm:$0xff] %v520
        %542 = vst [vmem:[%s260 + $0x10] sm:$0xff] %v524
        %543 = vst [vmem:[%s260 + $0x18] sm:$0xff] %v526
        %544 = vst [vmem:[%s260 + $0x20] sm:$0xff] %v530
        %545 = vst [vmem:[%s260 + $0x28] sm:$0xff] %v532
        %546 = vst [vmem:[%s260 + $0x30] sm:$0xff] %v536
        %547 = vst [vmem:[%s260 + $0x38] sm:$0xff] %v538
        %s548 = sand.u32 %s156, 1
        %s549 = scalar_lea.sflag [#allocation4], %s548
        %s550 = sand.u32 %s156, 1
        %s551 = smul.addr %s550, 64
        %s552 = scalar_lea.vmem [#allocation5], %s551
        // Predicated region
        $region45: #{tpu_custom_call.1} parent=39 // pred_check
          %p553 = pneg %p166
        $region46: #{tpu_custom_call.1} parent=39 // pred_check_branch
          %555 = sbr.rel (%p553) target = $region48
        $region47: #{tpu_custom_call.1} parent=39 // pred_region
          %s556 = smul.u32 2, %s27
          %s558 = ssub.s32 1024, 1024
          %559 = vsyncadd %s549, %s558
          %s560 = smul.addr %s26, 8
          %s561 = sadd.s32 %s556, %s560
          %s562 = smul.addr %s561, 128
          %s563 = scalar_lea.hbm %s5, %s562
          %s564 = sshll.u32 %s552, 4
          %s565 = int_to_ptr.vmem [resolvable:$true] %s564
          %570 = dma.vmem_to_hbm [thread:$0]  %s565, 1024, %s563, %s549, 256, 256, 16
        $region48: #{tpu_custom_call.1} parent=39 // pred_fallthru
          _
      $region40: #{tpu_custom_call.1} parent=5 // pred_fallthru
        _
      %p571 = scmp.le.s32.totalorder 2, %s17
      // Predicated region
      $region49: #{tpu_custom_call.1} parent=5 // pred_check
        %p572 = pneg %p571
      $region50: #{tpu_custom_call.1} parent=5 // pred_check_branch
        %574 = sbr.rel (%p572) target = $region52
      $region51: #{tpu_custom_call.1} parent=5 // pred_region
        %s575 = ssub.s32 %s17, 2
        // Predicated region
        $region53: #{tpu_custom_call.1} parent=51 // pred_check
          %p576 = pneg %p172
        $region54: #{tpu_custom_call.1} parent=51 // pred_check_branch
          %578 = sbr.rel (%p576) target = $region56
        $region55: #{tpu_custom_call.1} parent=51 // pred_region
          %s579 = sand.u32 %s157, 1
          %s580 = scalar_lea.sflag [#allocation4], %s579
          %s581 = sand.u32 %s157, 1
          %s582 = smul.addr %s581, 64
          %s583 = scalar_lea.vmem [#allocation5], %s582
          %584 = dma.done %s580, 1024
        $region56: #{tpu_custom_call.1} parent=51 // pred_fallthru
          _
      $region52: #{tpu_custom_call.1} parent=5 // pred_fallthru
        _
    $region6: #{tpu_custom_call.1} parent=1 // loop_footer
      %s21 = sadd.s32 1, %s17
    $region7: #{tpu_custom_call.1} parent=1 // loop_footer_branch
      %16 = sbr.rel target = $region3
    $region8: #{tpu_custom_call.1} parent=1 // loop_exit
      _
    %585 = vsyncpa [#allocation3], 1
    %s586 = scalar_lea.sflag [#allocation3], 1
    %587 = vsyncpa %s586, 1
    %588 = vsyncpa [#allocation4], 1
    %s589 = scalar_lea.sflag [#allocation4], 1
    %590 = vsyncpa %s589, 1

</llo_original>
